<compile_context>
chip_gen: v7x
topology: tpu7x:2x2x1
jax: 0.10.0
libtpu: 0.0.40
codegen_flags: <defaults>
</compile_context>

<pallas_src>
import functools

import jax
import jax.numpy as jnp
from jax.experimental import pallas as pl
from jax.experimental.pallas import tpu as pltpu


# ---------------------------------------------------------------------------
# Fused LinkPredictor kernel.
#   refs = (x_i, x_j, W_0, b_0, W_1, b_1, ..., W_{L-1}, b_{L-1}, out)
# Each grid step processes one (tm, c_in) row block of edges end-to-end.
# ---------------------------------------------------------------------------
def _make_linkpred_kernel(num_layers):
    def kernel(*refs):
        x_i_ref, x_j_ref = refs[0], refs[1]
        out_ref = refs[-1]
        wb_refs = refs[2:-1]

        # x = x_i * x_j   (elementwise, VPU)
        x = x_i_ref[...] * x_j_ref[...]

        # MLP layers, fully fused in-register / in-VMEM.
        for l in range(num_layers):
            w = wb_refs[2 * l][...]        # (c_prev, c_next)
            b = wb_refs[2 * l + 1][...]    # (1, c_next), broadcasts
            x = jnp.dot(x, w, preferred_element_type=jnp.float32) + b
            if l < num_layers - 1:
                x = jnp.maximum(x, 0.0)    # ReLU
                # TODO(synk): training-mode dropout would need pltpu.prng_*
                # masking; eval mode (training=False) makes it the identity.

        # Final sigmoid + store.
        out_ref[...] = jax.nn.sigmoid(x).astype(out_ref.dtype)

    return kernel


def link_predictor(x_i, x_j, weights, biases, *, tm=128):
    """weights[l]: (c_in_l, c_out_l) f32, biases[l]: (c_out_l,) f32."""
    E, c_in = x_i.shape
    assert x_j.shape == (E, c_in)
    num_layers = len(weights)
    c_out = weights[-1].shape[1]
    assert E % tm == 0 and tm % 8 == 0

    in_specs = [
        pl.BlockSpec((tm, c_in), lambda i: (i, 0)),   # x_i row block
        pl.BlockSpec((tm, c_in), lambda i: (i, 0)),   # x_j row block
    ]
    operands = [x_i, x_j]
    for w, b in zip(weights, biases):
        ci, co = w.shape
        # Constant index_map -> block never changes -> stays resident in VMEM.
        in_specs.append(pl.BlockSpec((ci, co), lambda i: (0, 0)))
        in_specs.append(pl.BlockSpec((1, co), lambda i: (0, 0)))
        operands.append(w)
        operands.append(b.reshape(1, co))

    return pl.pallas_call(
        _make_linkpred_kernel(num_layers),
        out_shape=jax.ShapeDtypeStruct((E, c_out), jnp.float32),
        grid=(E // tm,),
        in_specs=in_specs,
        out_specs=pl.BlockSpec((tm, c_out), lambda i: (i, 0)),
        compiler_params=pltpu.CompilerParams(
            dimension_semantics=("parallel",),
            vmem_limit_bytes=32 << 20),
    )(*operands)


# ---------------------------------------------------------------------------
# Pure-JAX reference for correctness checking.
# ---------------------------------------------------------------------------
def link_predictor_ref(x_i, x_j, weights, biases):
    x = x_i * x_j
    for l in range(len(weights) - 1):
        x = jnp.maximum(x @ weights[l] + biases[l], 0.0)
    x = x @ weights[-1] + biases[-1]
    return jax.nn.sigmoid(x)


if __name__ == "__main__":
    key = jax.random.PRNGKey(0)

    # Small shapes consistent with LinkPredictor:
    #   E edges, in_channels=32, hidden_channels=32, out_channels=1,
    #   num_layers=3, dropout=0.0 (eval).
    E, C_IN, C_HID, C_OUT = 256, 32, 32, 1
    NUM_LAYERS = 3

    k_xi, k_xj, *k_ws = jax.random.split(key, 2 + NUM_LAYERS)

    x_i = jax.random.normal(k_xi, (E, C_IN), dtype=jnp.float32)
    x_j = jax.random.normal(k_xj, (E, C_IN), dtype=jnp.float32)

    layer_dims = [(C_IN, C_HID)] + [(C_HID, C_HID)] * (NUM_LAYERS - 2) \
                 + [(C_HID, C_OUT)]

    weights, biases = [], []
    for (ci, co), kw in zip(layer_dims, k_ws):
        limit = (1.0 / ci) ** 0.5  # torch.nn.Linear default init range
        weights.append(jax.random.uniform(kw, (ci, co), dtype=jnp.float32,
                                          minval=-limit, maxval=limit))
        biases.append(jnp.zeros((co,), dtype=jnp.float32))

    out = link_predictor(x_i, x_j, weights, biases, tm=128)
    out = jax.block_until_ready(out)

    ref = link_predictor_ref(x_i, x_j, weights, biases)
    assert out.shape == (E, C_OUT)
    assert jnp.allclose(out, ref, atol=1e-5, rtol=1e-5), "mismatch vs reference"

    print("KERNEL_OK")
</pallas_src>

<mosaic_0001>
module attributes {stable_mosaic.version = 11 : i64} {
  func.func @kernel(%arg0: i32, %arg1: memref<128x32xf32, #tpu.memory_space<vmem>>, %arg2: memref<128x32xf32, #tpu.memory_space<vmem>>, %arg3: memref<32x32xf32, #tpu.memory_space<vmem>>, %arg4: memref<1x32xf32, #tpu.memory_space<vmem>>, %arg5: memref<32x32xf32, #tpu.memory_space<vmem>>, %arg6: memref<1x32xf32, #tpu.memory_space<vmem>>, %arg7: memref<32x1xf32, #tpu.memory_space<vmem>>, %arg8: memref<1x1xf32, #tpu.memory_space<vmem>>, %arg9: memref<128x1xf32, #tpu.memory_space<vmem>>) attributes {dimension_semantics = [#tpu.dimension_semantics<parallel>], iteration_bounds = array<i64: 2>, scalar_prefetch = 0 : i64, scratch_operands = 0 : i64, tpu.core_type = #tpu.core_type<tc>, window_params = [{transform_indices = @transform_0, window_bounds = array<i64: 128, 32>}, {transform_indices = @transform_1, window_bounds = array<i64: 128, 32>}, {pipeline_mode = #tpu.pipeline_mode<synchronous>, transform_indices = @transform_2, window_bounds = array<i64: 32, 32>}, {pipeline_mode = #tpu.pipeline_mode<synchronous>, transform_indices = @transform_3, window_bounds = array<i64: 1, 32>}, {pipeline_mode = #tpu.pipeline_mode<synchronous>, transform_indices = @transform_4, window_bounds = array<i64: 32, 32>}, {pipeline_mode = #tpu.pipeline_mode<synchronous>, transform_indices = @transform_5, window_bounds = array<i64: 1, 32>}, {pipeline_mode = #tpu.pipeline_mode<synchronous>, transform_indices = @transform_6, window_bounds = array<i64: 32, 1>}, {pipeline_mode = #tpu.pipeline_mode<synchronous>, transform_indices = @transform_7, window_bounds = array<i64: 1, 1>}, {transform_indices = @transform_8, window_bounds = array<i64: 128, 1>}]} {
    %c0 = arith.constant 0 : index
    %c0_0 = arith.constant 0 : index
    %0 = vector.load %arg1[%c0, %c0_0] : memref<128x32xf32, #tpu.memory_space<vmem>>, vector<128x32xf32>
    %c0_1 = arith.constant 0 : index
    %c0_2 = arith.constant 0 : index
    %1 = vector.load %arg2[%c0_1, %c0_2] : memref<128x32xf32, #tpu.memory_space<vmem>>, vector<128x32xf32>
    %2 = arith.mulf %0, %1 : vector<128x32xf32>
    %c0_3 = arith.constant 0 : index
    %c0_4 = arith.constant 0 : index
    %3 = vector.load %arg3[%c0_3, %c0_4] : memref<32x32xf32, #tpu.memory_space<vmem>>, vector<32x32xf32>
    %c0_5 = arith.constant 0 : index
    %c0_6 = arith.constant 0 : index
    %4 = vector.load %arg4[%c0_5, %c0_6] : memref<1x32xf32, #tpu.memory_space<vmem>>, vector<1x32xf32>
    %cst = arith.constant dense<0.000000e+00> : vector<128x32xf32>
    %5 = tpu.matmul %2, %3, %cst {dimension_numbers = #tpu.dot_dimension_numbers<[1], [0], [0], [1], [0, 0, 1, 1], [], []>} : vector<128x32xf32>, vector<32x32xf32>, vector<128x32xf32> -> vector<128x32xf32>
    %6 = vector.broadcast %4 : vector<1x32xf32> to vector<128x32xf32>
    %7 = arith.addf %5, %6 : vector<128x32xf32>
    %cst_7 = arith.constant 0.000000e+00 : f32
    %8 = vector.broadcast %cst_7 : f32 to vector<128x32xf32>
    %9 = arith.maximumf %7, %8 : vector<128x32xf32>
    %c0_8 = arith.constant 0 : index
    %c0_9 = arith.constant 0 : index
    %10 = vector.load %arg5[%c0_8, %c0_9] : memref<32x32xf32, #tpu.memory_space<vmem>>, vector<32x32xf32>
    %c0_10 = arith.constant 0 : index
    %c0_11 = arith.constant 0 : index
    %11 = vector.load %arg6[%c0_10, %c0_11] : memref<1x32xf32, #tpu.memory_space<vmem>>, vector<1x32xf32>
    %cst_12 = arith.constant dense<0.000000e+00> : vector<128x32xf32>
    %12 = tpu.matmul %9, %10, %cst_12 {dimension_numbers = #tpu.dot_dimension_numbers<[1], [0], [0], [1], [0, 0, 1, 1], [], []>} : vector<128x32xf32>, vector<32x32xf32>, vector<128x32xf32> -> vector<128x32xf32>
    %13 = vector.broadcast %11 : vector<1x32xf32> to vector<128x32xf32>
    %14 = arith.addf %12, %13 : vector<128x32xf32>
    %cst_13 = arith.constant 0.000000e+00 : f32
    %15 = vector.broadcast %cst_13 : f32 to vector<128x32xf32>
    %16 = arith.maximumf %14, %15 : vector<128x32xf32>
    %c0_14 = arith.constant 0 : index
    %c0_15 = arith.constant 0 : index
    %17 = vector.load %arg7[%c0_14, %c0_15] : memref<32x1xf32, #tpu.memory_space<vmem>>, vector<32x1xf32>
    %c0_16 = arith.constant 0 : index
    %c0_17 = arith.constant 0 : index
    %18 = vector.load %arg8[%c0_16, %c0_17] : memref<1x1xf32, #tpu.memory_space<vmem>>, vector<1x1xf32>
    %cst_18 = arith.constant dense<0.000000e+00> : vector<128x1xf32>
    %19 = tpu.matmul %16, %17, %cst_18 {dimension_numbers = #tpu.dot_dimension_numbers<[1], [0], [0], [1], [0, 0, 1, 1], [], []>} : vector<128x32xf32>, vector<32x1xf32>, vector<128x1xf32> -> vector<128x1xf32>
    %20 = vector.broadcast %18 : vector<1x1xf32> to vector<128x1xf32>
    %21 = arith.addf %19, %20 : vector<128x1xf32>
    %22 = arith.negf %21 : vector<128x1xf32>
    %23 = math.exp %22 : vector<128x1xf32>
    %cst_19 = arith.constant 1.000000e+00 : f32
    %24 = vector.broadcast %cst_19 : f32 to vector<128x1xf32>
    %25 = arith.addf %24, %23 : vector<128x1xf32>
    %26 = arith.divf %24, %25 : vector<128x1xf32>
    %c0_20 = arith.constant 0 : index
    %c0_21 = arith.constant 0 : index
    %27 = vector.load %arg9[%c0_20, %c0_21] : memref<128x1xf32, #tpu.memory_space<vmem>>, vector<128x1xf32>
    tpu.vector_store %arg9[%c0_20, %c0_21], %26 {strides = array<i32>} : memref<128x1xf32, #tpu.memory_space<vmem>>, vector<128x1xf32>,
    return
  }
  func.func @transform_0(%arg0: i32) -> (i32, i32) {
    %c0_i32 = arith.constant 0 : i32
    %c0_i32_0 = arith.constant 0 : i32
    return %arg0, %c0_i32 : i32, i32
  }
  func.func @transform_1(%arg0: i32) -> (i32, i32) {
    %c0_i32 = arith.constant 0 : i32
    %c0_i32_0 = arith.constant 0 : i32
    return %arg0, %c0_i32 : i32, i32
  }
  func.func @transform_2(%arg0: i32) -> (i32, i32) {
    %c0_i32 = arith.constant 0 : i32
    %c0_i32_0 = arith.constant 0 : i32
    %c0_i32_1 = arith.constant 0 : i32
    return %c0_i32, %c0_i32_0 : i32, i32
  }
  func.func @transform_3(%arg0: i32) -> (i32, i32) {
    %c0_i32 = arith.constant 0 : i32
    %c0_i32_0 = arith.constant 0 : i32
    %c0_i32_1 = arith.constant 0 : i32
    return %c0_i32, %c0_i32_0 : i32, i32
  }
  func.func @transform_4(%arg0: i32) -> (i32, i32) {
    %c0_i32 = arith.constant 0 : i32
    %c0_i32_0 = arith.constant 0 : i32
    %c0_i32_1 = arith.constant 0 : i32
    return %c0_i32, %c0_i32_0 : i32, i32
  }
  func.func @transform_5(%arg0: i32) -> (i32, i32) {
    %c0_i32 = arith.constant 0 : i32
    %c0_i32_0 = arith.constant 0 : i32
    %c0_i32_1 = arith.constant 0 : i32
    return %c0_i32, %c0_i32_0 : i32, i32
  }
  func.func @transform_6(%arg0: i32) -> (i32, i32) {
    %c0_i32 = arith.constant 0 : i32
    %c0_i32_0 = arith.constant 0 : i32
    %c0_i32_1 = arith.constant 0 : i32
    return %c0_i32, %c0_i32_0 : i32, i32
  }
  func.func @transform_7(%arg0: i32) -> (i32, i32) {
    %c0_i32 = arith.constant 0 : i32
    %c0_i32_0 = arith.constant 0 : i32
    %c0_i32_1 = arith.constant 0 : i32
    return %c0_i32, %c0_i32_0 : i32, i32
  }
  func.func @transform_8(%arg0: i32) -> (i32, i32) {
    %c0_i32 = arith.constant 0 : i32
    %c0_i32_0 = arith.constant 0 : i32
    return %arg0, %c0_i32 : i32, i32
  }
}

</mosaic_0001>

<llo_original>
// kernel: tpu_custom_call.1
$region0: #{tpu_custom_call.1}
  #allocation0 [shape = 'u32[]', space=smem, size = 0x4, offset = 0x4, fixed_abs, tag = 'smem constant byte address 0x4 - core index']
  #allocation1 [shape = 'u32[144,128]{1,0:T(1,128)}', space=vmem, size = 0x12000, scoped, tag = 'internal scratch']
  #allocation2 [shape = 'f32[1,1]{1,0:T(1,128)S(1)}', space=vmem, size = 0x200, scoped, tag = 'scoped memory for tpu_custom_call.1']
  %s0 = inlined_call_operand.vmem [shape: f32[256,32], index: 0, kind: input, shape index: {}]
  %s1 = inlined_call_operand.vmem [shape: f32[256,32], index: 1, kind: input, shape index: {}]
  %s2 = inlined_call_operand.vmem [shape: f32[32,32], index: 2, kind: input, shape index: {}]
  %s3 = inlined_call_operand.vmem [shape: f32[1,32], index: 3, kind: input, shape index: {}]
  %s4 = inlined_call_operand.vmem [shape: f32[32,32], index: 4, kind: input, shape index: {}]
  %s5 = inlined_call_operand.vmem [shape: f32[1,32], index: 5, kind: input, shape index: {}]
  %s6 = inlined_call_operand.vmem [shape: f32[32,1], index: 6, kind: input, shape index: {}]
  %s7 = inlined_call_operand.<no memory space> [shape: f32[1,1], index: 7, kind: input, shape index: {}]
  %s8 = inlined_call_operand.vmem [shape: f32[256,1], index: 8, kind: output, shape index: {}]
  %s9 = sld [smem:[#allocation0]]
  $region65: #{tpu_custom_call.1} parent=0
    _
  %s11 = ssub.s32 1, %s9
  %s12 = scalar_select 0, %s11, %s9
  %v13 = vstv %s7
  %14 = vst [vmem:[#allocation2] sm:$0x1] %v13
  loop: start=0, step=1, limit=4
  $region2: #{tpu_custom_call.1} parent=0 // loop_pre_header
    _
  $region3: #{tpu_custom_call.1} parent=0 // loop_header
    %s16 = sphi 0, %s20
    %p17 = scmp.ge.s32.totalorder %s16, 4
    %s26 = sphi 0, %s28
    %s29 = sphi 0, %s26
    %s30 = sphi 0, %s29
    %s46 = sphi 0, %s30
    %s52 = sphi 0, %s54
    %s55 = sphi 0, %s52
    %s56 = sphi 0, %s55
    %s72 = sphi 0, %s56
    %s76 = sphi 0, %s76
    %s78 = sphi 0, %s76
    %s79 = sphi 0, %s78
    %s93 = sphi 0, %s79
    %s97 = sphi 0, %s97
    %s99 = sphi 0, %s97
    %s100 = sphi 0, %s99
    %s114 = sphi 0, %s100
    %s118 = sphi 0, %s118
    %s120 = sphi 0, %s118
    %s121 = sphi 0, %s120
    %s135 = sphi 0, %s121
    %s139 = sphi 0, %s139
    %s141 = sphi 0, %s139
    %s142 = sphi 0, %s141
    %s156 = sphi 0, %s142
    %s160 = sphi 0, %s160
    %s162 = sphi 0, %s160
    %s163 = sphi 0, %s162
    %s177 = sphi 0, %s163
    %s181 = sphi 0, %s181
    %s183 = sphi 0, %s181
    %s184 = sphi 0, %s183
    %s198 = sphi 0, %s184
    %s204 = sphi 0, %s206
    %s207 = sphi 0, %s204
    %s208 = sphi 0, %s207
    %s224 = sphi 0, %s208
  $region4: #{tpu_custom_call.1} parent=0 // loop_header_branch
    %19 = sbr.rel (%p17) target = $region8
  $region5: #{tpu_custom_call.1} parent=0 // loop_body
    %s21 = ssub.s32 %s16, 1
    %s22 = ssub.s32 %s16, 2
    %s23 = sadd.s32 %s16, 1
    %s24 = ssub.s32 %s16, %s23
    %p25 = scmp.eq.s32.totalorder %s24, 0
    %s27 = sadd.s32 %s26, 1
    %s28 = scalar_select %p25, %s26, %s27
    %p31 = pneg %p25
    %p32 = scmp.eq.s32.totalorder %s16, 1
    %p33 = por %p31, %p32
    %p34 = scmp.ne.s32.totalorder %s26, %s29
    %p35 = scmp.eq.s32.totalorder %s16, 0
    %p36 = por %p34, %p35
    %p37 = scmp.ne.s32.totalorder %s26, %s29
    %p38 = scmp.eq.s32.totalorder %s21, 1
    %p39 = por %p37, %p38
    %p40 = scmp.ne.s32.totalorder %s29, %s30
    %p41 = scmp.eq.s32.totalorder %s21, 0
    %p42 = por %p40, %p41
    %p43 = scmp.ne.s32.totalorder %s29, %s30
    %p44 = scmp.eq.s32.totalorder %s22, 1
    %p45 = por %p43, %p44
    %p47 = scmp.ne.s32.totalorder %s30, %s46
    %p48 = scmp.eq.s32.totalorder %s22, 0
    %p49 = por %p47, %p48
    %s50 = ssub.s32 %s16, %s23
    %p51 = scmp.eq.s32.totalorder %s50, 0
    %s53 = sadd.s32 %s52, 1
    %s54 = scalar_select %p51, %s52, %s53
    %p57 = pneg %p51
    %p58 = scmp.eq.s32.totalorder %s16, 1
    %p59 = por %p57, %p58
    %p60 = scmp.ne.s32.totalorder %s52, %s55
    %p61 = scmp.eq.s32.totalorder %s16, 0
    %p62 = por %p60, %p61
    %p63 = scmp.ne.s32.totalorder %s52, %s55
    %p64 = scmp.eq.s32.totalorder %s21, 1
    %p65 = por %p63, %p64
    %p66 = scmp.ne.s32.totalorder %s55, %s56
    %p67 = scmp.eq.s32.totalorder %s21, 0
    %p68 = por %p66, %p67
    %p69 = scmp.ne.s32.totalorder %s55, %s56
    %p70 = scmp.eq.s32.totalorder %s22, 1
    %p71 = por %p69, %p70
    %p73 = scmp.ne.s32.totalorder %s56, %s72
    %p74 = scmp.eq.s32.totalorder %s22, 0
    %p75 = por %p73, %p74
    %s77 = sadd.s32 %s76, 1
    %p80 = scmp.eq.s32.totalorder %s16, 1
    %p81 = scmp.ne.s32.totalorder %s76, %s78
    %p82 = scmp.eq.s32.totalorder %s16, 0
    %p83 = por %p81, %p82
    %p84 = scmp.ne.s32.totalorder %s76, %s78
    %p85 = scmp.eq.s32.totalorder %s21, 1
    %p86 = por %p84, %p85
    %p87 = scmp.ne.s32.totalorder %s78, %s79
    %p88 = scmp.eq.s32.totalorder %s21, 0
    %p89 = por %p87, %p88
    %p90 = scmp.ne.s32.totalorder %s78, %s79
    %p91 = scmp.eq.s32.totalorder %s22, 1
    %p92 = por %p90, %p91
    %p94 = scmp.ne.s32.totalorder %s79, %s93
    %p95 = scmp.eq.s32.totalorder %s22, 0
    %p96 = por %p94, %p95
    %s98 = sadd.s32 %s97, 1
    %p101 = scmp.eq.s32.totalorder %s16, 1
    %p102 = scmp.ne.s32.totalorder %s97, %s99
    %p103 = scmp.eq.s32.totalorder %s16, 0
    %p104 = por %p102, %p103
    %p105 = scmp.ne.s32.totalorder %s97, %s99
    %p106 = scmp.eq.s32.totalorder %s21, 1
    %p107 = por %p105, %p106
    %p108 = scmp.ne.s32.totalorder %s99, %s100
    %p109 = scmp.eq.s32.totalorder %s21, 0
    %p110 = por %p108, %p109
    %p111 = scmp.ne.s32.totalorder %s99, %s100
    %p112 = scmp.eq.s32.totalorder %s22, 1
    %p113 = por %p111, %p112
    %p115 = scmp.ne.s32.totalorder %s100, %s114
    %p116 = scmp.eq.s32.totalorder %s22, 0
    %p117 = por %p115, %p116
    %s119 = sadd.s32 %s118, 1
    %p122 = scmp.eq.s32.totalorder %s16, 1
    %p123 = scmp.ne.s32.totalorder %s118, %s120
    %p124 = scmp.eq.s32.totalorder %s16, 0
    %p125 = por %p123, %p124
    %p126 = scmp.ne.s32.totalorder %s118, %s120
    %p127 = scmp.eq.s32.totalorder %s21, 1
    %p128 = por %p126, %p127
    %p129 = scmp.ne.s32.totalorder %s120, %s121
    %p130 = scmp.eq.s32.totalorder %s21, 0
    %p131 = por %p129, %p130
    %p132 = scmp.ne.s32.totalorder %s120, %s121
    %p133 = scmp.eq.s32.totalorder %s22, 1
    %p134 = por %p132, %p133
    %p136 = scmp.ne.s32.totalorder %s121, %s135
    %p137 = scmp.eq.s32.totalorder %s22, 0
    %p138 = por %p136, %p137
    %s140 = sadd.s32 %s139, 1
    %p143 = scmp.eq.s32.totalorder %s16, 1
    %p144 = scmp.ne.s32.totalorder %s139, %s141
    %p145 = scmp.eq.s32.totalorder %s16, 0
    %p146 = por %p144, %p145
    %p147 = scmp.ne.s32.totalorder %s139, %s141
    %p148 = scmp.eq.s32.totalorder %s21, 1
    %p149 = por %p147, %p148
    %p150 = scmp.ne.s32.totalorder %s141, %s142
    %p151 = scmp.eq.s32.totalorder %s21, 0
    %p152 = por %p150, %p151
    %p153 = scmp.ne.s32.totalorder %s141, %s142
    %p154 = scmp.eq.s32.totalorder %s22, 1
    %p155 = por %p153, %p154
    %p157 = scmp.ne.s32.totalorder %s142, %s156
    %p158 = scmp.eq.s32.totalorder %s22, 0
    %p159 = por %p157, %p158
    %s161 = sadd.s32 %s160, 1
    %p164 = scmp.eq.s32.totalorder %s16, 1
    %p165 = scmp.ne.s32.totalorder %s160, %s162
    %p166 = scmp.eq.s32.totalorder %s16, 0
    %p167 = por %p165, %p166
    %p168 = scmp.ne.s32.totalorder %s160, %s162
    %p169 = scmp.eq.s32.totalorder %s21, 1
    %p170 = por %p168, %p169
    %p171 = scmp.ne.s32.totalorder %s162, %s163
    %p172 = scmp.eq.s32.totalorder %s21, 0
    %p173 = por %p171, %p172
    %p174 = scmp.ne.s32.totalorder %s162, %s163
    %p175 = scmp.eq.s32.totalorder %s22, 1
    %p176 = por %p174, %p175
    %p178 = scmp.ne.s32.totalorder %s163, %s177
    %p179 = scmp.eq.s32.totalorder %s22, 0
    %p180 = por %p178, %p179
    %s182 = sadd.s32 %s181, 1
    %p185 = scmp.eq.s32.totalorder %s16, 1
    %p186 = scmp.ne.s32.totalorder %s181, %s183
    %p187 = scmp.eq.s32.totalorder %s16, 0
    %p188 = por %p186, %p187
    %p189 = scmp.ne.s32.totalorder %s181, %s183
    %p190 = scmp.eq.s32.totalorder %s21, 1
    %p191 = por %p189, %p190
    %p192 = scmp.ne.s32.totalorder %s183, %s184
    %p193 = scmp.eq.s32.totalorder %s21, 0
    %p194 = por %p192, %p193
    %p195 = scmp.ne.s32.totalorder %s183, %s184
    %p196 = scmp.eq.s32.totalorder %s22, 1
    %p197 = por %p195, %p196
    %p199 = scmp.ne.s32.totalorder %s184, %s198
    %p200 = scmp.eq.s32.totalorder %s22, 0
    %p201 = por %p199, %p200
    %s202 = ssub.s32 %s16, %s23
    %p203 = scmp.eq.s32.totalorder %s202, 0
    %s205 = sadd.s32 %s204, 1
    %s206 = scalar_select %p203, %s204, %s205
    %p209 = pneg %p203
    %p210 = scmp.eq.s32.totalorder %s16, 1
    %p211 = por %p209, %p210
    %p212 = scmp.ne.s32.totalorder %s204, %s207
    %p213 = scmp.eq.s32.totalorder %s16, 0
    %p214 = por %p212, %p213
    %p215 = scmp.ne.s32.totalorder %s204, %s207
    %p216 = scmp.eq.s32.totalorder %s21, 1
    %p217 = por %p215, %p216
    %p218 = scmp.ne.s32.totalorder %s207, %s208
    %p219 = scmp.eq.s32.totalorder %s21, 0
    %p220 = por %p218, %p219
    %p221 = scmp.ne.s32.totalorder %s207, %s208
    %p222 = scmp.eq.s32.totalorder %s22, 1
    %p223 = por %p221, %p222
    %p225 = scmp.ne.s32.totalorder %s208, %s224
    %p226 = scmp.eq.s32.totalorder %s22, 0
    %p227 = por %p225, %p226
    %p228 = scmp.le.s32.totalorder 1, %s16
    %p229 = scmp.lt.s32.totalorder %s16, 3
    %p230 = pnand %p228, %p229
    %p231 = pneg %p230
    // Predicated region
    $region9: #{tpu_custom_call.1} parent=5 // pred_check
      _
    $region10: #{tpu_custom_call.1} parent=5 // pred_check_branch
      %233 = sbr.rel (%p230) target = $region12
    $region11: #{tpu_custom_call.1} parent=5 // pred_region
      %s234 = ssub.s32 %s16, 1
      // Predicated region
      $region13: #{tpu_custom_call.1} parent=11 // pred_check
        %p235 = pneg %p89
      $region14: #{tpu_custom_call.1} parent=11 // pred_check_branch
        %237 = sbr.rel (%p235) target = $region16
      $region15: #{tpu_custom_call.1} parent=11 // pred_region
        _
      $region16: #{tpu_custom_call.1} parent=11 // pred_fallthru
        _
      // Predicated region
      $region17: #{tpu_custom_call.1} parent=11 // pred_check
        %p238 = pneg %p110
      $region18: #{tpu_custom_call.1} parent=11 // pred_check_branch
        %240 = sbr.rel (%p238) target = $region20
      $region19: #{tpu_custom_call.1} parent=11 // pred_region
        _
      $region20: #{tpu_custom_call.1} parent=11 // pred_fallthru
        _
      // Predicated region
      $region21: #{tpu_custom_call.1} parent=11 // pred_check
        %p241 = pneg %p131
      $region22: #{tpu_custom_call.1} parent=11 // pred_check_branch
        %243 = sbr.rel (%p241) target = $region24
      $region23: #{tpu_custom_call.1} parent=11 // pred_region
        _
      $region24: #{tpu_custom_call.1} parent=11 // pred_fallthru
        _
      // Predicated region
      $region25: #{tpu_custom_call.1} parent=11 // pred_check
        %p244 = pneg %p152
      $region26: #{tpu_custom_call.1} parent=11 // pred_check_branch
        %246 = sbr.rel (%p244) target = $region28
      $region27: #{tpu_custom_call.1} parent=11 // pred_region
        _
      $region28: #{tpu_custom_call.1} parent=11 // pred_fallthru
        _
      // Predicated region
      $region29: #{tpu_custom_call.1} parent=11 // pred_check
        %p247 = pneg %p173
      $region30: #{tpu_custom_call.1} parent=11 // pred_check_branch
        %249 = sbr.rel (%p247) target = $region32
      $region31: #{tpu_custom_call.1} parent=11 // pred_region
        _
      $region32: #{tpu_custom_call.1} parent=11 // pred_fallthru
        _
      // Predicated region
      $region33: #{tpu_custom_call.1} parent=11 // pred_check
        %p250 = pneg %p194
      $region34: #{tpu_custom_call.1} parent=11 // pred_check_branch
        %252 = sbr.rel (%p250) target = $region36
      $region35: #{tpu_custom_call.1} parent=11 // pred_region
        _
      $region36: #{tpu_custom_call.1} parent=11 // pred_fallthru
        _
    $region12: #{tpu_custom_call.1} parent=5 // pred_fallthru
      _
    %p253 = scmp.lt.s32.totalorder %s16, 2
    // Predicated region
    $region37: #{tpu_custom_call.1} parent=5 // pred_check
      %p254 = pneg %p253
    $region38: #{tpu_custom_call.1} parent=5 // pred_check_branch
      %256 = sbr.rel (%p254) target = $region40
    $region39: #{tpu_custom_call.1} parent=5 // pred_region
      // Predicated region
      $region41: #{tpu_custom_call.1} parent=39 // pred_check
        %p257 = pneg %p36
      $region42: #{tpu_custom_call.1} parent=39 // pred_check_branch
        %259 = sbr.rel (%p257) target = $region44
      $region43: #{tpu_custom_call.1} parent=39 // pred_region
        %s260 = smul.u32 16, %s16
        %p261 = scmp.lt.s32.totalorder %s260, 31
        %s262 = scalar_select %p261, %s260, 31
        %s263 = smul.addr %s262, 8
        %s264 = scalar_lea.vmem %s0, %s263
        %s265 = smul.u32 16, %s16
      $region44: #{tpu_custom_call.1} parent=39 // pred_fallthru
        _
      // Predicated region
      $region45: #{tpu_custom_call.1} parent=39 // pred_check
        %p266 = pneg %p62
      $region46: #{tpu_custom_call.1} parent=39 // pred_check_branch
        %268 = sbr.rel (%p266) target = $region48
      $region47: #{tpu_custom_call.1} parent=39 // pred_region
        %s269 = smul.u32 16, %s16
        %p270 = scmp.lt.s32.totalorder %s269, 31
        %s271 = scalar_select %p270, %s269, 31
        %s272 = smul.addr %s271, 8
        %s273 = scalar_lea.vmem %s1, %s272
        %s274 = smul.u32 16, %s16
      $region48: #{tpu_custom_call.1} parent=39 // pred_fallthru
        _
    $region40: #{tpu_custom_call.1} parent=5 // pred_fallthru
      _
    %p275 = scmp.le.s32.totalorder 1, %s16
    %p276 = scmp.lt.s32.totalorder %s16, 3
    %p277 = pnand %p275, %p276
    %p278 = pneg %p277
    // Predicated region
    $region49: #{tpu_custom_call.1} parent=5 // pred_check
      _
    $region50: #{tpu_custom_call.1} parent=5 // pred_check_branch
      %280 = sbr.rel (%p277) target = $region52
    $region51: #{tpu_custom_call.1} parent=5 // pred_region
      %s281 = ssub.s32 %s16, 1
      %s282 = smul.u32 16, %s21
      %p283 = scmp.lt.s32.totalorder %s282, 31
      %s284 = scalar_select %p283, %s282, 31
      %s285 = smul.addr %s284, 8
      %s286 = scalar_lea.vmem %s0, %s285
      %p287 = pneg %p42
      %p288 = pneg %p39
      %s289 = smul.u32 16, %s21
      %p290 = scmp.lt.s32.totalorder %s289, 31
      %s291 = scalar_select %p290, %s289, 31
      %s292 = smul.addr %s291, 8
      %s293 = scalar_lea.vmem %s1, %s292
      %p294 = pneg %p68
      %p295 = pneg %p65
      %p296 = pneg %p89
      %p297 = pneg %p86
      %p298 = pneg %p110
      %p299 = pneg %p107
      %p300 = pneg %p131
      %p301 = pneg %p128
      %p302 = pneg %p152
      %p303 = pneg %p149
      %p304 = pneg %p173
      %p305 = pneg %p170
      %p306 = pneg %p194
      %p307 = pneg %p191
      %p308 = pneg %p220
      %p309 = pneg %p217
      %s310 = smul.u32 16, %s21
      %p311 = scmp.lt.s32.totalorder %s310, 31
      %s312 = scalar_select %p311, %s310, 31
      %s313 = smul.addr %s312, 8
      %s314 = scalar_lea.vmem %s8, %s313
      %s315 = smul.u32 16, %s21
      %p316 = scmp.lt.s32.totalorder %s315, 31
      %s317 = scalar_select %p316, %s315, 31
      %s318 = smul.addr %s317, 8
      %s319 = scalar_lea.vmem %s0, %s318
      %s320 = smul.u32 16, %s21
      %s321 = smul.u32 16, %s21
      %p322 = scmp.lt.s32.totalorder %s321, 31
      %s323 = scalar_select %p322, %s321, 31
      %s324 = smul.addr %s323, 8
      %s325 = scalar_lea.vmem %s1, %s324
      %s326 = smul.u32 16, %s21
      %s327 = smul.u32 16, %s21
      %p328 = scmp.lt.s32.totalorder %s327, 31
      %s329 = scalar_select %p328, %s327, 31
      %s330 = smul.addr %s329, 8
      %s331 = scalar_lea.vmem %s8, %s330
      %s332 = smul.u32 16, %s21
      %v333 = vld [vmem:[%s319] sm:$0xff]
      %v334 = vld [vmem:[%s319 + $0x8] sm:$0xff]
      %v335 = vld [vmem:[%s319 + $0x10] sm:$0xff]
      %v336 = vld [vmem:[%s319 + $0x18] sm:$0xff]
      %v337 = vld [vmem:[%s319 + $0x20] sm:$0xff]
      %v338 = vld [vmem:[%s319 + $0x28] sm:$0xff]
      %v339 = vld [vmem:[%s319 + $0x30] sm:$0xff]
      %v340 = vld [vmem:[%s319 + $0x38] sm:$0xff]
      %v341 = vld [vmem:[%s319 + $0x40] sm:$0xff]
      %v342 = vld [vmem:[%s319 + $0x48] sm:$0xff]
      %v343 = vld [vmem:[%s319 + $0x50] sm:$0xff]
      %v344 = vld [vmem:[%s319 + $0x58] sm:$0xff]
      %v345 = vld [vmem:[%s319 + $0x60] sm:$0xff]
      %v346 = vld [vmem:[%s319 + $0x68] sm:$0xff]
      %v347 = vld [vmem:[%s319 + $0x70] sm:$0xff]
      %v348 = vld [vmem:[%s319 + $0x78] sm:$0xff]
      %v349 = vld [vmem:[%s325] sm:$0xff]
      %v350 = vld [vmem:[%s325 + $0x8] sm:$0xff]
      %v351 = vld [vmem:[%s325 + $0x10] sm:$0xff]
      %v352 = vld [vmem:[%s325 + $0x18] sm:$0xff]
      %v353 = vld [vmem:[%s325 + $0x20] sm:$0xff]
      %v354 = vld [vmem:[%s325 + $0x28] sm:$0xff]
      %v355 = vld [vmem:[%s325 + $0x30] sm:$0xff]
      %v356 = vld [vmem:[%s325 + $0x38] sm:$0xff]
      %v357 = vld [vmem:[%s325 + $0x40] sm:$0xff]
      %v358 = vld [vmem:[%s325 + $0x48] sm:$0xff]
      %v359 = vld [vmem:[%s325 + $0x50] sm:$0xff]
      %v360 = vld [vmem:[%s325 + $0x58] sm:$0xff]
      %v361 = vld [vmem:[%s325 + $0x60] sm:$0xff]
      %v362 = vld [vmem:[%s325 + $0x68] sm:$0xff]
      %v363 = vld [vmem:[%s325 + $0x70] sm:$0xff]
      %v364 = vld [vmem:[%s325 + $0x78] sm:$0xff]
      %v365 = vmul.f32 %v333, %v349
      %v366 = vmul.f32 %v334, %v350
      %v367 = vmul.f32 %v335, %v351
      %v368 = vmul.f32 %v336, %v352
      %v369 = vmul.f32 %v337, %v353
      %v370 = vmul.f32 %v338, %v354
      %v371 = vmul.f32 %v339, %v355
      %v372 = vmul.f32 %v340, %v356
      %v373 = vmul.f32 %v341, %v357
      %v374 = vmul.f32 %v342, %v358
      %v375 = vmul.f32 %v343, %v359
      %v376 = vmul.f32 %v344, %v360
      %v377 = vmul.f32 %v345, %v361
      %v378 = vmul.f32 %v346, %v362
      %v379 = vmul.f32 %v347, %v363
      %v380 = vmul.f32 %v348, %v364
      %v381 = vld [vmem:[%s2] sm:$0xff]
      %v382 = vld [vmem:[%s2 + $0x8] sm:$0xff]
      %v383 = vld [vmem:[%s2 + $0x10] sm:$0xff]
      %v384 = vld [vmem:[%s2 + $0x18] sm:$0xff]
      %v385 = vld [vmem:[%s3] sm:$0x1]
      %v387 = vlaneseq
      %v388 = vshrl.u32 %v387, 7
      %v389 = vsub.s32 0, %v388
      %v390 = vrot.slane %v385, %v389
      %vm392 = vcmask 261120
      %v394 = vsel %vm392, %v365, 0
      %v397 = vsel %vm392, %v366, 0
      %v400 = vsel %vm392, %v367, 0
      %v403 = vsel %vm392, %v368, 0
      %v406 = vsel %vm392, %v369, 0
      %v409 = vsel %vm392, %v370, 0
      %v412 = vsel %vm392, %v371, 0
      %v415 = vsel %vm392, %v372, 0
      %v418 = vsel %vm392, %v373, 0
      %v421 = vsel %vm392, %v374, 0
      %v424 = vsel %vm392, %v375, 0
      %v427 = vsel %vm392, %v376, 0
      %v430 = vsel %vm392, %v377, 0
      %v433 = vsel %vm392, %v378, 0
      %v436 = vsel %vm392, %v379, 0
      %v439 = vsel %vm392, %v380, 0
      %441 = vmatprep.subr.mxu0 0.0
      %442 = vmatpush1.msra.mxu0 %v381
      %443 = vmatprep.subr.mxu0 0.0
      %444 = vmatpush1.msra.mxu0 %v382
      %445 = vmatprep.subr.mxu0 0.0
      %446 = vmatpush1.msra.mxu0 %v383
      %447 = vmatprep.subr.mxu0 0.0
      %448 = vmatpush1.msra.mxu0 %v384
      %449 = vmatprep.subr.mxu0 0.0
      %450 = vmatpush1.msra.mxu0 0.0
      %451 = vmatprep.subr.mxu0 0.0
      %452 = vmatpush1.msra.mxu0 0.0
      %453 = vmatprep.subr.mxu0 0.0
      %454 = vmatpush1.msra.mxu0 0.0
      %455 = vmatprep.subr.mxu0 0.0
      %456 = vmatpush1.msra.mxu0 0.0
      %457 = vmatprep.subr.mxu0 0.0
      %458 = vmatpush1.msra.mxu0 0.0
      %459 = vmatprep.subr.mxu0 0.0
      %460 = vmatpush1.msra.mxu0 0.0
      %461 = vmatprep.subr.mxu0 0.0
      %462 = vmatpush1.msra.mxu0 0.0
      %463 = vmatprep.subr.mxu0 0.0
      %464 = vmatpush1.msra.mxu0 0.0
      %465 = vmatprep.subr.mxu0 0.0
      %466 = vmatpush1.msra.mxu0 0.0
      %467 = vmatprep.subr.mxu0 0.0
      %468 = vmatpush1.msra.mxu0 0.0
      %469 = vmatprep.subr.mxu0 0.0
      %470 = vmatpush1.msra.mxu0 0.0
      %471 = vmatprep.subr.mxu0 0.0
      %472 = vmatpush1.msra.mxu0 0.0
      %473 = vmatprep.subr.mxu0 0.0
      %474 = vmatpush1.msra.mxu0 0.0
      %475 = vmatprep.subr.mxu0 0.0
      %476 = vmatpush1.msra.mxu0 0.0
      %477 = vmatprep.subr.mxu0 0.0
      %478 = vmatpush1.msra.mxu0 0.0
      %479 = vmatprep.subr.mxu0 0.0
      %480 = vmatpush1.msra.mxu0 0.0
      %481 = vmatprep.subr.mxu0 0.0
      %482 = vmatpush1.msra.mxu0 0.0
      %483 = vmatprep.subr.mxu0 0.0
      %484 = vmatpush1.msra.mxu0 0.0
      %485 = vmatprep.subr.mxu0 0.0
      %486 = vmatpush1.msra.mxu0 0.0
      %487 = vmatprep.subr.mxu0 0.0
      %488 = vmatpush1.msra.mxu0 0.0
      %489 = vmatprep.subr.mxu0 0.0
      %490 = vmatpush1.msra.mxu0 0.0
      %491 = vmatprep.subr.mxu0 0.0
      %492 = vmatpush1.msra.mxu0 0.0
      %493 = vmatprep.subr.mxu0 0.0
      %494 = vmatpush1.msra.mxu0 0.0
      %495 = vmatprep.subr.mxu0 0.0
      %496 = vmatpush1.msra.mxu0 0.0
      %497 = vmatprep.subr.mxu0 0.0
      %498 = vmatpush1.msra.mxu0 0.0
      %499 = vmatprep.subr.mxu0 0.0
      %500 = vmatpush1.msra.mxu0 0.0
      %501 = vmatprep.subr.mxu0 0.0
      %502 = vmatpush1.msra.mxu0 0.0
      %503 = vmatprep.subr.mxu0 0.0
      %504 = vmatpush1.msra.mxu0 0.0
      %505 = vmatprep.mubr.f32.mxu0 0.0
      %506 = vmatmul.mubr.f32.gmra.mrb[0].mxu0 %v394
      %v507 = vpop.f32.mrb[0].mxu0
      %v508 = vadd.f32 %v390, %v507
      %v509 = vpop.f32.mrb[0].mxu0
      %510 = vmatprep.mubr.f32.mxu0 0.0
      %511 = vmatmul.mubr.f32.gmra.mrb[0].mxu0 %v397
      %v512 = vpop.f32.mrb[0].mxu0
      %v513 = vadd.f32 %v390, %v512
      %v514 = vpop.f32.mrb[0].mxu0
      %515 = vmatprep.mubr.f32.mxu0 0.0
      %516 = vmatmul.mubr.f32.gmra.mrb[0].mxu0 %v400
      %v517 = vpop.f32.mrb[0].mxu0
      %v518 = vadd.f32 %v390, %v517
      %v519 = vpop.f32.mrb[0].mxu0
      %520 = vmatprep.mubr.f32.mxu0 0.0
      %521 = vmatmul.mubr.f32.gmra.mrb[0].mxu0 %v403
      %v522 = vpop.f32.mrb[0].mxu0
      %v523 = vadd.f32 %v390, %v522
      %v524 = vpop.f32.mrb[0].mxu0
      %525 = vmatprep.mubr.f32.mxu0 0.0
      %526 = vmatmul.mubr.f32.gmra.mrb[0].mxu0 %v406
      %v527 = vpop.f32.mrb[0].mxu0
      %v528 = vadd.f32 %v390, %v527
      %v529 = vpop.f32.mrb[0].mxu0
      %530 = vmatprep.mubr.f32.mxu0 0.0
      %531 = vmatmul.mubr.f32.gmra.mrb[0].mxu0 %v409
      %v532 = vpop.f32.mrb[0].mxu0
      %v533 = vadd.f32 %v390, %v532
      %v534 = vpop.f32.mrb[0].mxu0
      %535 = vmatprep.mubr.f32.mxu0 0.0
      %536 = vmatmul.mubr.f32.gmra.mrb[0].mxu0 %v412
      %v537 = vpop.f32.mrb[0].mxu0
      %v538 = vadd.f32 %v390, %v537
      %v539 = vpop.f32.mrb[0].mxu0
      %540 = vmatprep.mubr.f32.mxu0 0.0
      %541 = vmatmul.mubr.f32.gmra.mrb[0].mxu0 %v415
      %v542 = vpop.f32.mrb[0].mxu0
      %v543 = vadd.f32 %v390, %v542
      %v544 = vpop.f32.mrb[0].mxu0
      %545 = vmatprep.mubr.f32.mxu0 0.0
      %546 = vmatmul.mubr.f32.gmra.mrb[0].mxu0 %v418
      %v547 = vpop.f32.mrb[0].mxu0
      %v548 = vadd.f32 %v390, %v547
      %v549 = vpop.f32.mrb[0].mxu0
      %550 = vmatprep.mubr.f32.mxu0 0.0
      %551 = vmatmul.mubr.f32.gmra.mrb[0].mxu0 %v421
      %v552 = vpop.f32.mrb[0].mxu0
      %v553 = vadd.f32 %v390, %v552
      %v554 = vpop.f32.mrb[0].mxu0
      %555 = vmatprep.mubr.f32.mxu0 0.0
      %556 = vmatmul.mubr.f32.gmra.mrb[0].mxu0 %v424
      %v557 = vpop.f32.mrb[0].mxu0
      %v558 = vadd.f32 %v390, %v557
      %v559 = vpop.f32.mrb[0].mxu0
      %560 = vmatprep.mubr.f32.mxu0 0.0
      %561 = vmatmul.mubr.f32.gmra.mrb[0].mxu0 %v427
      %v562 = vpop.f32.mrb[0].mxu0
      %v563 = vadd.f32 %v390, %v562
      %v564 = vpop.f32.mrb[0].mxu0
      %565 = vmatprep.mubr.f32.mxu0 0.0
      %566 = vmatmul.mubr.f32.gmra.mrb[0].mxu0 %v430
      %v567 = vpop.f32.mrb[0].mxu0
      %v568 = vadd.f32 %v390, %v567
      %v569 = vpop.f32.mrb[0].mxu0
      %570 = vmatprep.mubr.f32.mxu0 0.0
      %571 = vmatmul.mubr.f32.gmra.mrb[0].mxu0 %v433
      %v572 = vpop.f32.mrb[0].mxu0
      %v573 = vadd.f32 %v390, %v572
      %v574 = vpop.f32.mrb[0].mxu0
      %575 = vmatprep.mubr.f32.mxu0 0.0
      %576 = vmatmul.mubr.f32.gmra.mrb[0].mxu0 %v436
      %v577 = vpop.f32.mrb[0].mxu0
      %v578 = vadd.f32 %v390, %v577
      %v579 = vpop.f32.mrb[0].mxu0
      %580 = vmatprep.mubr.f32.mxu0 0.0
      %581 = vmatmul.mubr.f32.gmra.mrb[0].mxu0 %v439
      %v582 = vpop.f32.mrb[0].mxu0
      %v583 = vadd.f32 %v390, %v582
      %v584 = vpop.f32.mrb[0].mxu0
      %585 = vdwg.mxu0
      %v586 = vmax.f32 %v508, 0.0
      %v587 = vmax.f32 %v513, 0.0
      %v588 = vmax.f32 %v518, 0.0
      %v589 = vmax.f32 %v523, 0.0
      %v590 = vmax.f32 %v528, 0.0
      %v591 = vmax.f32 %v533, 0.0
      %v592 = vmax.f32 %v538, 0.0
      %v593 = vmax.f32 %v543, 0.0
      %v594 = vmax.f32 %v548, 0.0
      %v595 = vmax.f32 %v553, 0.0
      %v596 = vmax.f32 %v558, 0.0
      %v597 = vmax.f32 %v563, 0.0
      %v598 = vmax.f32 %v568, 0.0
      %v599 = vmax.f32 %v573, 0.0
      %v600 = vmax.f32 %v578, 0.0
      %v601 = vmax.f32 %v583, 0.0
      %v602 = vld [vmem:[%s4] sm:$0xff]
      %v603 = vld [vmem:[%s4 + $0x8] sm:$0xff]
      %v604 = vld [vmem:[%s4 + $0x10] sm:$0xff]
      %v605 = vld [vmem:[%s4 + $0x18] sm:$0xff]
      %v606 = vld [vmem:[%s5] sm:$0x1]
      %v608 = vlaneseq
      %v609 = vshrl.u32 %v608, 7
      %v610 = vsub.s32 0, %v609
      %v611 = vrot.slane %v606, %v610
      %v614 = vsel %vm392, %v586, 0
      %v617 = vsel %vm392, %v587, 0
      %v620 = vsel %vm392, %v588, 0
      %v623 = vsel %vm392, %v589, 0
      %v626 = vsel %vm392, %v590, 0
      %v629 = vsel %vm392, %v591, 0
      %v632 = vsel %vm392, %v592, 0
      %v635 = vsel %vm392, %v593, 0
      %v638 = vsel %vm392, %v594, 0
      %v641 = vsel %vm392, %v595, 0
      %v644 = vsel %vm392, %v596, 0
      %v647 = vsel %vm392, %v597, 0
      %v650 = vsel %vm392, %v598, 0
      %v653 = vsel %vm392, %v599, 0
      %v656 = vsel %vm392, %v600, 0
      %v659 = vsel %vm392, %v601, 0
      %661 = vmatprep.subr.mxu0 0.0
      %662 = vmatpush1.msra.mxu0 %v602
      %663 = vmatprep.subr.mxu0 0.0
      %664 = vmatpush1.msra.mxu0 %v603
      %665 = vmatprep.subr.mxu0 0.0
      %666 = vmatpush1.msra.mxu0 %v604
      %667 = vmatprep.subr.mxu0 0.0
      %668 = vmatpush1.msra.mxu0 %v605
      %669 = vmatprep.subr.mxu0 0.0
      %670 = vmatpush1.msra.mxu0 0.0
      %671 = vmatprep.subr.mxu0 0.0
      %672 = vmatpush1.msra.mxu0 0.0
      %673 = vmatprep.subr.mxu0 0.0
      %674 = vmatpush1.msra.mxu0 0.0
      %675 = vmatprep.subr.mxu0 0.0
      %676 = vmatpush1.msra.mxu0 0.0
      %677 = vmatprep.subr.mxu0 0.0
      %678 = vmatpush1.msra.mxu0 0.0
      %679 = vmatprep.subr.mxu0 0.0
      %680 = vmatpush1.msra.mxu0 0.0
      %681 = vmatprep.subr.mxu0 0.0
      %682 = vmatpush1.msra.mxu0 0.0
      %683 = vmatprep.subr.mxu0 0.0
      %684 = vmatpush1.msra.mxu0 0.0
      %685 = vmatprep.subr.mxu0 0.0
      %686 = vmatpush1.msra.mxu0 0.0
      %687 = vmatprep.subr.mxu0 0.0
      %688 = vmatpush1.msra.mxu0 0.0
      %689 = vmatprep.subr.mxu0 0.0
      %690 = vmatpush1.msra.mxu0 0.0
      %691 = vmatprep.subr.mxu0 0.0
      %692 = vmatpush1.msra.mxu0 0.0
      %693 = vmatprep.subr.mxu0 0.0
      %694 = vmatpush1.msra.mxu0 0.0
      %695 = vmatprep.subr.mxu0 0.0
      %696 = vmatpush1.msra.mxu0 0.0
      %697 = vmatprep.subr.mxu0 0.0
      %698 = vmatpush1.msra.mxu0 0.0
      %699 = vmatprep.subr.mxu0 0.0
      %700 = vmatpush1.msra.mxu0 0.0
      %701 = vmatprep.subr.mxu0 0.0
      %702 = vmatpush1.msra.mxu0 0.0
      %703 = vmatprep.subr.mxu0 0.0
      %704 = vmatpush1.msra.mxu0 0.0
      %705 = vmatprep.subr.mxu0 0.0
      %706 = vmatpush1.msra.mxu0 0.0
      %707 = vmatprep.subr.mxu0 0.0
      %708 = vmatpush1.msra.mxu0 0.0
      %709 = vmatprep.subr.mxu0 0.0
      %710 = vmatpush1.msra.mxu0 0.0
      %711 = vmatprep.subr.mxu0 0.0
      %712 = vmatpush1.msra.mxu0 0.0
      %713 = vmatprep.subr.mxu0 0.0
      %714 = vmatpush1.msra.mxu0 0.0
      %715 = vmatprep.subr.mxu0 0.0
      %716 = vmatpush1.msra.mxu0 0.0
      %717 = vmatprep.subr.mxu0 0.0
      %718 = vmatpush1.msra.mxu0 0.0
      %719 = vmatprep.subr.mxu0 0.0
      %720 = vmatpush1.msra.mxu0 0.0
      %721 = vmatprep.subr.mxu0 0.0
      %722 = vmatpush1.msra.mxu0 0.0
      %723 = vmatprep.subr.mxu0 0.0
      %724 = vmatpush1.msra.mxu0 0.0
      %725 = vmatprep.mubr.f32.mxu0 0.0
      %726 = vmatmul.mubr.f32.gmra.mrb[0].mxu0 %v614
      %v727 = vpop.f32.mrb[0].mxu0
      %v728 = vadd.f32 %v611, %v727
      %v729 = vpop.f32.mrb[0].mxu0
      %730 = vmatprep.mubr.f32.mxu0 0.0
      %731 = vmatmul.mubr.f32.gmra.mrb[0].mxu0 %v617
      %v732 = vpop.f32.mrb[0].mxu0
      %v733 = vadd.f32 %v611, %v732
      %v734 = vpop.f32.mrb[0].mxu0
      %735 = vmatprep.mubr.f32.mxu0 0.0
      %736 = vmatmul.mubr.f32.gmra.mrb[0].mxu0 %v620
      %v737 = vpop.f32.mrb[0].mxu0
      %v738 = vadd.f32 %v611, %v737
      %v739 = vpop.f32.mrb[0].mxu0
      %740 = vmatprep.mubr.f32.mxu0 0.0
      %741 = vmatmul.mubr.f32.gmra.mrb[0].mxu0 %v623
      %v742 = vpop.f32.mrb[0].mxu0
      %v743 = vadd.f32 %v611, %v742
      %v744 = vpop.f32.mrb[0].mxu0
      %745 = vmatprep.mubr.f32.mxu0 0.0
      %746 = vmatmul.mubr.f32.gmra.mrb[0].mxu0 %v626
      %v747 = vpop.f32.mrb[0].mxu0
      %v748 = vadd.f32 %v611, %v747
      %v749 = vpop.f32.mrb[0].mxu0
      %750 = vmatprep.mubr.f32.mxu0 0.0
      %751 = vmatmul.mubr.f32.gmra.mrb[0].mxu0 %v629
      %v752 = vpop.f32.mrb[0].mxu0
      %v753 = vadd.f32 %v611, %v752
      %v754 = vpop.f32.mrb[0].mxu0
      %755 = vmatprep.mubr.f32.mxu0 0.0
      %756 = vmatmul.mubr.f32.gmra.mrb[0].mxu0 %v632
      %v757 = vpop.f32.mrb[0].mxu0
      %v758 = vadd.f32 %v611, %v757
      %v759 = vpop.f32.mrb[0].mxu0
      %760 = vmatprep.mubr.f32.mxu0 0.0
      %761 = vmatmul.mubr.f32.gmra.mrb[0].mxu0 %v635
      %v762 = vpop.f32.mrb[0].mxu0
      %v763 = vadd.f32 %v611, %v762
      %v764 = vpop.f32.mrb[0].mxu0
      %765 = vmatprep.mubr.f32.mxu0 0.0
      %766 = vmatmul.mubr.f32.gmra.mrb[0].mxu0 %v638
      %v767 = vpop.f32.mrb[0].mxu0
      %v768 = vadd.f32 %v611, %v767
      %v769 = vpop.f32.mrb[0].mxu0
      %770 = vmatprep.mubr.f32.mxu0 0.0
      %771 = vmatmul.mubr.f32.gmra.mrb[0].mxu0 %v641
      %v772 = vpop.f32.mrb[0].mxu0
      %v773 = vadd.f32 %v611, %v772
      %v774 = vpop.f32.mrb[0].mxu0
      %775 = vmatprep.mubr.f32.mxu0 0.0
      %776 = vmatmul.mubr.f32.gmra.mrb[0].mxu0 %v644
      %v777 = vpop.f32.mrb[0].mxu0
      %v778 = vadd.f32 %v611, %v777
      %v779 = vpop.f32.mrb[0].mxu0
      %780 = vmatprep.mubr.f32.mxu0 0.0
      %781 = vmatmul.mubr.f32.gmra.mrb[0].mxu0 %v647
      %v782 = vpop.f32.mrb[0].mxu0
      %v783 = vadd.f32 %v611, %v782
      %v784 = vpop.f32.mrb[0].mxu0
      %785 = vmatprep.mubr.f32.mxu0 0.0
      %786 = vmatmul.mubr.f32.gmra.mrb[0].mxu0 %v650
      %v787 = vpop.f32.mrb[0].mxu0
      %v788 = vadd.f32 %v611, %v787
      %v789 = vpop.f32.mrb[0].mxu0
      %790 = vmatprep.mubr.f32.mxu0 0.0
      %791 = vmatmul.mubr.f32.gmra.mrb[0].mxu0 %v653
      %v792 = vpop.f32.mrb[0].mxu0
      %v793 = vadd.f32 %v611, %v792
      %v794 = vpop.f32.mrb[0].mxu0
      %795 = vmatprep.mubr.f32.mxu0 0.0
      %796 = vmatmul.mubr.f32.gmra.mrb[0].mxu0 %v656
      %v797 = vpop.f32.mrb[0].mxu0
      %v798 = vadd.f32 %v611, %v797
      %v799 = vpop.f32.mrb[0].mxu0
      %800 = vmatprep.mubr.f32.mxu0 0.0
      %801 = vmatmul.mubr.f32.gmra.mrb[0].mxu0 %v659
      %v802 = vpop.f32.mrb[0].mxu0
      %v803 = vadd.f32 %v611, %v802
      %v804 = vpop.f32.mrb[0].mxu0
      %805 = vdwg.mxu0
      %v806 = vmax.f32 %v728, 0.0
      %v807 = vmax.f32 %v733, 0.0
      %v808 = vmax.f32 %v738, 0.0
      %v809 = vmax.f32 %v743, 0.0
      %v810 = vmax.f32 %v748, 0.0
      %v811 = vmax.f32 %v753, 0.0
      %v812 = vmax.f32 %v758, 0.0
      %v813 = vmax.f32 %v763, 0.0
      %v814 = vmax.f32 %v768, 0.0
      %v815 = vmax.f32 %v773, 0.0
      %v816 = vmax.f32 %v778, 0.0
      %v817 = vmax.f32 %v783, 0.0
      %v818 = vmax.f32 %v788, 0.0
      %v819 = vmax.f32 %v793, 0.0
      %v820 = vmax.f32 %v798, 0.0
      %v821 = vmax.f32 %v803, 0.0
      %v822 = vld [vmem:[%s6] sm:$0xff]
      %v823 = vld [vmem:[%s6 + $0x8] sm:$0xff]
      %v824 = vld [vmem:[%s6 + $0x10] sm:$0xff]
      %v825 = vld [vmem:[%s6 + $0x18] sm:$0xff]
      %v826 = vld [vmem:[#allocation2] sm:$0x1]
      %v828 = vlaneseq
      %v829 = vshrl.u32 %v828, 7
      %v830 = vsub.s32 0, %v829
      %v831 = vrot.slane %v826, %v830
      %v834 = vsel %vm392, %v806, 0
      %v837 = vsel %vm392, %v807, 0
      %v840 = vsel %vm392, %v808, 0
      %v843 = vsel %vm392, %v809, 0
      %v846 = vsel %vm392, %v810, 0
      %v849 = vsel %vm392, %v811, 0
      %v852 = vsel %vm392, %v812, 0
      %v855 = vsel %vm392, %v813, 0
      %v858 = vsel %vm392, %v814, 0
      %v861 = vsel %vm392, %v815, 0
      %v864 = vsel %vm392, %v816, 0
      %v867 = vsel %vm392, %v817, 0
      %v870 = vsel %vm392, %v818, 0
      %v873 = vsel %vm392, %v819, 0
      %v876 = vsel %vm392, %v820, 0
      %v879 = vsel %vm392, %v821, 0
      %881 = vmatprep.subr.mxu0 0.0
      %882 = vmatpush1.msra.mxu0 %v822
      %883 = vmatprep.subr.mxu0 0.0
      %884 = vmatpush1.msra.mxu0 %v823
      %885 = vmatprep.subr.mxu0 0.0
      %886 = vmatpush1.msra.mxu0 %v824
      %887 = vmatprep.subr.mxu0 0.0
      %888 = vmatpush1.msra.mxu0 %v825
      %889 = vmatprep.subr.mxu0 0.0
      %890 = vmatpush1.msra.mxu0 0.0
      %891 = vmatprep.subr.mxu0 0.0
      %892 = vmatpush1.msra.mxu0 0.0
      %893 = vmatprep.subr.mxu0 0.0
      %894 = vmatpush1.msra.mxu0 0.0
      %895 = vmatprep.subr.mxu0 0.0
      %896 = vmatpush1.msra.mxu0 0.0
      %897 = vmatprep.subr.mxu0 0.0
      %898 = vmatpush1.msra.mxu0 0.0
      %899 = vmatprep.subr.mxu0 0.0
      %900 = vmatpush1.msra.mxu0 0.0
      %901 = vmatprep.subr.mxu0 0.0
      %902 = vmatpush1.msra.mxu0 0.0
      %903 = vmatprep.subr.mxu0 0.0
      %904 = vmatpush1.msra.mxu0 0.0
      %905 = vmatprep.subr.mxu0 0.0
      %906 = vmatpush1.msra.mxu0 0.0
      %907 = vmatprep.subr.mxu0 0.0
      %908 = vmatpush1.msra.mxu0 0.0
      %909 = vmatprep.subr.mxu0 0.0
      %910 = vmatpush1.msra.mxu0 0.0
      %911 = vmatprep.subr.mxu0 0.0
      %912 = vmatpush1.msra.mxu0 0.0
      %913 = vmatprep.subr.mxu0 0.0
      %914 = vmatpush1.msra.mxu0 0.0
      %915 = vmatprep.subr.mxu0 0.0
      %916 = vmatpush1.msra.mxu0 0.0
      %917 = vmatprep.subr.mxu0 0.0
      %918 = vmatpush1.msra.mxu0 0.0
      %919 = vmatprep.subr.mxu0 0.0
      %920 = vmatpush1.msra.mxu0 0.0
      %921 = vmatprep.subr.mxu0 0.0
      %922 = vmatpush1.msra.mxu0 0.0
      %923 = vmatprep.subr.mxu0 0.0
      %924 = vmatpush1.msra.mxu0 0.0
      %925 = vmatprep.subr.mxu0 0.0
      %926 = vmatpush1.msra.mxu0 0.0
      %927 = vmatprep.subr.mxu0 0.0
      %928 = vmatpush1.msra.mxu0 0.0
      %929 = vmatprep.subr.mxu0 0.0
      %930 = vmatpush1.msra.mxu0 0.0
      %931 = vmatprep.subr.mxu0 0.0
      %932 = vmatpush1.msra.mxu0 0.0
      %933 = vmatprep.subr.mxu0 0.0
      %934 = vmatpush1.msra.mxu0 0.0
      %935 = vmatprep.subr.mxu0 0.0
      %936 = vmatpush1.msra.mxu0 0.0
      %937 = vmatprep.subr.mxu0 0.0
      %938 = vmatpush1.msra.mxu0 0.0
      %939 = vmatprep.subr.mxu0 0.0
      %940 = vmatpush1.msra.mxu0 0.0
      %941 = vmatprep.subr.mxu0 0.0
      %942 = vmatpush1.msra.mxu0 0.0
      %943 = vmatprep.subr.mxu0 0.0
      %944 = vmatpush1.msra.mxu0 0.0
      %945 = vmatprep.mubr.f32.mxu0 0.0
      %946 = vmatmul.mubr.f32.gmra.mrb[0].mxu0 %v834
      %v947 = vpop.f32.mrb[0].mxu0
      %v948 = vadd.f32 %v831, %v947
      %v949 = vpop.f32.mrb[0].mxu0
      %950 = vmatprep.mubr.f32.mxu0 0.0
      %951 = vmatmul.mubr.f32.gmra.mrb[0].mxu0 %v837
      %v952 = vpop.f32.mrb[0].mxu0
      %v953 = vadd.f32 %v831, %v952
      %v954 = vpop.f32.mrb[0].mxu0
      %955 = vmatprep.mubr.f32.mxu0 0.0
      %956 = vmatmul.mubr.f32.gmra.mrb[0].mxu0 %v840
      %v957 = vpop.f32.mrb[0].mxu0
      %v958 = vadd.f32 %v831, %v957
      %v959 = vpop.f32.mrb[0].mxu0
      %960 = vmatprep.mubr.f32.mxu0 0.0
      %961 = vmatmul.mubr.f32.gmra.mrb[0].mxu0 %v843
      %v962 = vpop.f32.mrb[0].mxu0
      %v963 = vadd.f32 %v831, %v962
      %v964 = vpop.f32.mrb[0].mxu0
      %965 = vmatprep.mubr.f32.mxu0 0.0
      %966 = vmatmul.mubr.f32.gmra.mrb[0].mxu0 %v846
      %v967 = vpop.f32.mrb[0].mxu0
      %v968 = vadd.f32 %v831, %v967
      %v969 = vpop.f32.mrb[0].mxu0
      %970 = vmatprep.mubr.f32.mxu0 0.0
      %971 = vmatmul.mubr.f32.gmra.mrb[0].mxu0 %v849
      %v972 = vpop.f32.mrb[0].mxu0
      %v973 = vadd.f32 %v831, %v972
      %v974 = vpop.f32.mrb[0].mxu0
      %975 = vmatprep.mubr.f32.mxu0 0.0
      %976 = vmatmul.mubr.f32.gmra.mrb[0].mxu0 %v852
      %v977 = vpop.f32.mrb[0].mxu0
      %v978 = vadd.f32 %v831, %v977
      %v979 = vpop.f32.mrb[0].mxu0
      %980 = vmatprep.mubr.f32.mxu0 0.0
      %981 = vmatmul.mubr.f32.gmra.mrb[0].mxu0 %v855
      %v982 = vpop.f32.mrb[0].mxu0
      %v983 = vadd.f32 %v831, %v982
      %v984 = vpop.f32.mrb[0].mxu0
      %985 = vmatprep.mubr.f32.mxu0 0.0
      %986 = vmatmul.mubr.f32.gmra.mrb[0].mxu0 %v858
      %v987 = vpop.f32.mrb[0].mxu0
      %v988 = vadd.f32 %v831, %v987
      %v989 = vpop.f32.mrb[0].mxu0
      %990 = vmatprep.mubr.f32.mxu0 0.0
      %991 = vmatmul.mubr.f32.gmra.mrb[0].mxu0 %v861
      %v992 = vpop.f32.mrb[0].mxu0
      %v993 = vadd.f32 %v831, %v992
      %v994 = vpop.f32.mrb[0].mxu0
      %995 = vmatprep.mubr.f32.mxu0 0.0
      %996 = vmatmul.mubr.f32.gmra.mrb[0].mxu0 %v864
      %v997 = vpop.f32.mrb[0].mxu0
      %v998 = vadd.f32 %v831, %v997
      %v999 = vpop.f32.mrb[0].mxu0
      %1000 = vmatprep.mubr.f32.mxu0 0.0
      %1001 = vmatmul.mubr.f32.gmra.mrb[0].mxu0 %v867
      %v1002 = vpop.f32.mrb[0].mxu0
      %v1003 = vadd.f32 %v831, %v1002
      %v1004 = vpop.f32.mrb[0].mxu0
      %1005 = vmatprep.mubr.f32.mxu0 0.0
      %1006 = vmatmul.mubr.f32.gmra.mrb[0].mxu0 %v870
      %v1007 = vpop.f32.mrb[0].mxu0
      %v1008 = vadd.f32 %v831, %v1007
      %v1009 = vpop.f32.mrb[0].mxu0
      %1010 = vmatprep.mubr.f32.mxu0 0.0
      %1011 = vmatmul.mubr.f32.gmra.mrb[0].mxu0 %v873
      %v1012 = vpop.f32.mrb[0].mxu0
      %v1013 = vadd.f32 %v831, %v1012
      %v1014 = vpop.f32.mrb[0].mxu0
      %1015 = vmatprep.mubr.f32.mxu0 0.0
      %1016 = vmatmul.mubr.f32.gmra.mrb[0].mxu0 %v876
      %v1017 = vpop.f32.mrb[0].mxu0
      %v1018 = vadd.f32 %v831, %v1017
      %v1019 = vpop.f32.mrb[0].mxu0
      %1020 = vmatprep.mubr.f32.mxu0 0.0
      %1021 = vmatmul.mubr.f32.gmra.mrb[0].mxu0 %v879
      %v1022 = vpop.f32.mrb[0].mxu0
      %v1023 = vadd.f32 %v831, %v1022
      %v1024 = vpop.f32.mrb[0].mxu0
      %1025 = vdwg.mxu0
      %v1026 = vxor.u32 %v948, 2147483648
      %v1027 = vxor.u32 %v953, 2147483648
      %v1028 = vxor.u32 %v958, 2147483648
      %v1029 = vxor.u32 %v963, 2147483648
      %v1030 = vxor.u32 %v968, 2147483648
      %v1031 = vxor.u32 %v973, 2147483648
      %v1032 = vxor.u32 %v978, 2147483648
      %v1033 = vxor.u32 %v983, 2147483648
      %v1034 = vxor.u32 %v988, 2147483648
      %v1035 = vxor.u32 %v993, 2147483648
      %v1036 = vxor.u32 %v998, 2147483648
      %v1037 = vxor.u32 %v1003, 2147483648
      %v1038 = vxor.u32 %v1008, 2147483648
      %v1039 = vxor.u32 %v1013, 2147483648
      %v1040 = vxor.u32 %v1018, 2147483648
      %v1041 = vxor.u32 %v1023, 2147483648
      %v1042 = vmul.f32 %v1026, 1.442695
      %v1043 = vpow.pop %v1042
      %v1044 = vmul.f32 %v1027, 1.442695
      %v1045 = vpow.pop %v1044
      %v1046 = vmul.f32 %v1028, 1.442695
      %v1047 = vpow.pop %v1046
      %v1048 = vmul.f32 %v1029, 1.442695
      %v1049 = vpow.pop %v1048
      %v1050 = vmul.f32 %v1030, 1.442695
      %v1051 = vpow.pop %v1050
      %v1052 = vmul.f32 %v1031, 1.442695
      %v1053 = vpow.pop %v1052
      %v1054 = vmul.f32 %v1032, 1.442695
      %v1055 = vpow.pop %v1054
      %v1056 = vmul.f32 %v1033, 1.442695
      %v1057 = vpow.pop %v1056
      %v1058 = vmul.f32 %v1034, 1.442695
      %v1059 = vpow.pop %v1058
      %v1060 = vmul.f32 %v1035, 1.442695
      %v1061 = vpow.pop %v1060
      %v1062 = vmul.f32 %v1036, 1.442695
      %v1063 = vpow.pop %v1062
      %v1064 = vmul.f32 %v1037, 1.442695
      %v1065 = vpow.pop %v1064
      %v1066 = vmul.f32 %v1038, 1.442695
      %v1067 = vpow.pop %v1066
      %v1068 = vmul.f32 %v1039, 1.442695
      %v1069 = vpow.pop %v1068
      %v1070 = vmul.f32 %v1040, 1.442695
      %v1071 = vpow.pop %v1070
      %v1072 = vmul.f32 %v1041, 1.442695
      %v1073 = vpow.pop %v1072
      %v1074 = vadd.f32 %v1043, 1.0
      %v1075 = vadd.f32 %v1045, 1.0
      %v1076 = vadd.f32 %v1047, 1.0
      %v1077 = vadd.f32 %v1049, 1.0
      %v1078 = vadd.f32 %v1051, 1.0
      %v1079 = vadd.f32 %v1053, 1.0
      %v1080 = vadd.f32 %v1055, 1.0
      %v1081 = vadd.f32 %v1057, 1.0
      %v1082 = vadd.f32 %v1059, 1.0
      %v1083 = vadd.f32 %v1061, 1.0
      %v1084 = vadd.f32 %v1063, 1.0
      %v1085 = vadd.f32 %v1065, 1.0
      %v1086 = vadd.f32 %v1067, 1.0
      %v1087 = vadd.f32 %v1069, 1.0
      %v1088 = vadd.f32 %v1071, 1.0
      %v1089 = vadd.f32 %v1073, 1.0
      %v1090 = vrcp.pop %v1074
      %v1091 = vmul.f32 1.0, %v1090
      %v1092 = vrcp.pop %v1075
      %v1093 = vmul.f32 1.0, %v1092
      %v1094 = vrcp.pop %v1076
      %v1095 = vmul.f32 1.0, %v1094
      %v1096 = vrcp.pop %v1077
      %v1097 = vmul.f32 1.0, %v1096
      %v1098 = vrcp.pop %v1078
      %v1099 = vmul.f32 1.0, %v1098
      %v1100 = vrcp.pop %v1079
      %v1101 = vmul.f32 1.0, %v1100
      %v1102 = vrcp.pop %v1080
      %v1103 = vmul.f32 1.0, %v1102
      %v1104 = vrcp.pop %v1081
      %v1105 = vmul.f32 1.0, %v1104
      %v1106 = vrcp.pop %v1082
      %v1107 = vmul.f32 1.0, %v1106
      %v1108 = vrcp.pop %v1083
      %v1109 = vmul.f32 1.0, %v1108
      %v1110 = vrcp.pop %v1084
      %v1111 = vmul.f32 1.0, %v1110
      %v1112 = vrcp.pop %v1085
      %v1113 = vmul.f32 1.0, %v1112
      %v1114 = vrcp.pop %v1086
      %v1115 = vmul.f32 1.0, %v1114
      %v1116 = vrcp.pop %v1087
      %v1117 = vmul.f32 1.0, %v1116
      %v1118 = vrcp.pop %v1088
      %v1119 = vmul.f32 1.0, %v1118
      %v1120 = vrcp.pop %v1089
      %v1121 = vmul.f32 1.0, %v1120
      %vm1122 = vcmask 7168
      %1123 = vst.msk [vmem:[%s331] sm:$0xff] %vm1122, %v1091
      %1124 = vst.msk [vmem:[%s331 + $0x8] sm:$0xff] %vm1122, %v1093
      %1125 = vst.msk [vmem:[%s331 + $0x10] sm:$0xff] %vm1122, %v1095
      %1126 = vst.msk [vmem:[%s331 + $0x18] sm:$0xff] %vm1122, %v1097
      %1127 = vst.msk [vmem:[%s331 + $0x20] sm:$0xff] %vm1122, %v1099
      %1128 = vst.msk [vmem:[%s331 + $0x28] sm:$0xff] %vm1122, %v1101
      %1129 = vst.msk [vmem:[%s331 + $0x30] sm:$0xff] %vm1122, %v1103
      %1130 = vst.msk [vmem:[%s331 + $0x38] sm:$0xff] %vm1122, %v1105
      %1131 = vst.msk [vmem:[%s331 + $0x40] sm:$0xff] %vm1122, %v1107
      %1132 = vst.msk [vmem:[%s331 + $0x48] sm:$0xff] %vm1122, %v1109
      %1133 = vst.msk [vmem:[%s331 + $0x50] sm:$0xff] %vm1122, %v1111
      %1134 = vst.msk [vmem:[%s331 + $0x58] sm:$0xff] %vm1122, %v1113
      %1135 = vst.msk [vmem:[%s331 + $0x60] sm:$0xff] %vm1122, %v1115
      %1136 = vst.msk [vmem:[%s331 + $0x68] sm:$0xff] %vm1122, %v1117
      %1137 = vst.msk [vmem:[%s331 + $0x70] sm:$0xff] %vm1122, %v1119
      %1138 = vst.msk [vmem:[%s331 + $0x78] sm:$0xff] %vm1122, %v1121
      %s1139 = smul.u32 16, %s21
      %p1140 = scmp.lt.s32.totalorder %s1139, 31
      %s1141 = scalar_select %p1140, %s1139, 31
      %s1142 = smul.addr %s1141, 8
      %s1143 = scalar_lea.vmem %s8, %s1142
      // Predicated region
      $region53: #{tpu_custom_call.1} parent=51 // pred_check
        %p1144 = pneg %p217
      $region54: #{tpu_custom_call.1} parent=51 // pred_check_branch
        %1146 = sbr.rel (%p1144) target = $region56
      $region55: #{tpu_custom_call.1} parent=51 // pred_region
        %s1147 = smul.u32 16, %s21
      $region56: #{tpu_custom_call.1} parent=51 // pred_fallthru
        _
    $region52: #{tpu_custom_call.1} parent=5 // pred_fallthru
      _
    %p1148 = scmp.le.s32.totalorder 2, %s16
    // Predicated region
    $region57: #{tpu_custom_call.1} parent=5 // pred_check
      %p1149 = pneg %p1148
    $region58: #{tpu_custom_call.1} parent=5 // pred_check_branch
      %1151 = sbr.rel (%p1149) target = $region60
    $region59: #{tpu_custom_call.1} parent=5 // pred_region
      %s1152 = ssub.s32 %s16, 2
      // Predicated region
      $region61: #{tpu_custom_call.1} parent=59 // pred_check
        %p1153 = pneg %p223
      $region62: #{tpu_custom_call.1} parent=59 // pred_check_branch
        %1155 = sbr.rel (%p1153) target = $region64
      $region63: #{tpu_custom_call.1} parent=59 // pred_region
        %s1156 = smul.u32 16, %s22
        %p1157 = scmp.lt.s32.totalorder %s1156, 31
        %s1158 = scalar_select %p1157, %s1156, 31
        %s1159 = smul.addr %s1158, 8
        %s1160 = scalar_lea.vmem %s8, %s1159
      $region64: #{tpu_custom_call.1} parent=59 // pred_fallthru
        _
    $region60: #{tpu_custom_call.1} parent=5 // pred_fallthru
      _
  $region6: #{tpu_custom_call.1} parent=0 // loop_footer
    %s20 = sadd.s32 1, %s16
  $region7: #{tpu_custom_call.1} parent=0 // loop_footer_branch
    %15 = sbr.rel target = $region3
  $region8: #{tpu_custom_call.1} parent=0 // loop_exit
    _

</llo_original>
